<compile_context>
chip_gen: v7x
topology: tpu7x:2x2x1
jax: 0.10.0
libtpu: 0.0.40
codegen_flags: <defaults>
</compile_context>

<pallas_src>
import jax
import jax.numpy as jnp
from jax.experimental import pallas as pl
from jax.experimental.pallas import tpu as pltpu


def _pick_batch_tile(batch_pad, seq, hidden):
    """Pick TB (batch elements per grid step).

    `batch_pad` is a multiple of 8, so every candidate TB is a multiple of 8:
    the in-kernel (S, TB, H) <-> (S*TB, H) reshapes stay sublane-tile aligned
    and the BlockSpec second-minor rule is always satisfied.
    """
    cands = [tb for tb in range(8, batch_pad + 1, 8) if batch_pad % tb == 0]

    # Per-step VMEM estimate: double-buffered enc block + ~4 full-tile f32
    # temporaries (pre-activation, tanh, broadcast products) + weights.
    def vmem_bytes(tb):
        blk = seq * tb * hidden * 4
        return 2 * blk + 4 * blk + hidden * hidden * 4

    budget = 12 * 1024 * 1024   # stays under default scoped VMEM on v5e/v6e/v7x
    fits = [tb for tb in cands if vmem_bytes(tb) <= budget] or [cands[0]]

    # Prefer grid > 1 (input pipelining; megacore sharding of the batch axis).
    multi = [tb for tb in fits if tb < batch_pad] or fits

    # Fill the MXU / amortize the ~0.35us per-grid-step overhead, without
    # blowing up the tile for long sequences (TB = 8 always qualifies).
    good = [tb for tb in multi if tb * seq <= max(512, 8 * seq)] or [multi[0]]
    return max(good)


def _make_attention_kernel(tb, seq, hidden):
    def kernel(enc_ref, hb_ref, w1a_ref, w2_ref, b2_ref, out_ref):
        # enc_ref : (S, TB, H)  encoder block (one strided DMA per grid step)
        # hb_ref  : (TB, H)     hoisted hidden projection  hidden @ W1b^T + b1
        # w1a_ref : (H, H)      W1a^T (acts on the encoder half of attn1)
        # w2_ref  : (1, H)      attn2 weight row
        # b2_ref  : (1,)        attn2 bias (SMEM scalar; cancels in softmax)
        # out_ref : (TB, H)     context rows
        enc = enc_ref[...]                                       # (S, TB, H) f32

        # attn1: one MXU matmul with M = S*TB rows.  TB % 8 == 0 makes the
        # reshape a pure re-indexing of sublane tiles (no data movement).
        pre = jnp.dot(enc.reshape(seq * tb, hidden), w1a_ref[...],
                      preferred_element_type=jnp.float32)        # (S*TB, H)
        pre = pre.reshape(seq, tb, hidden) + hb_ref[...][None, :, :]
        t = jnp.tanh(pre)                                        # (S, TB, H)

        # attn2 energy: VPU multiply + lane reduce (no N=1 MXU matmul).
        e = jnp.sum(t * w2_ref[...][None, :, :], axis=2,
                    keepdims=True) + b2_ref[0]                   # (S, TB, 1)

        # Softmax over the seq axis, vectorized over all TB batch elements.
        m = jnp.max(e, axis=0, keepdims=True)                    # (1, TB, 1)
        p = jnp.exp(e - m)                                       # (S, TB, 1)
        denom = jnp.sum(p, axis=0, keepdims=True)                # (1, TB, 1)
        inv = pl.reciprocal(denom, approx=True)                  # EUP seed
        inv = inv * (2.0 - denom * inv)                          # one Newton step
        alpha = p * inv                                          # (S, TB, 1)

        # context = sum_s alpha[s] * enc[s]: lane-broadcast mult + seq reduce.
        ctx = jnp.sum(alpha * enc, axis=0)                       # (TB, H)
        out_ref[...] = ctx.astype(out_ref.dtype)

    return kernel


def prepare_attention_params(params):
    """One-time weight prep (splits / transposes), outside the per-call path."""
    w1, b1, w2, b2 = params["w1"], params["b1"], params["w2"], params["b2"]
    H = w1.shape[0]
    return {
        "w1a_t": jnp.asarray(w1[:, :H].T),        # (H, H) acts on the encoder part
        "w1b_t": jnp.asarray(w1[:, H:].T),        # (H, H) acts on the hidden part
        "b1": jnp.asarray(b1),                    # (H,)
        "w2_row": jnp.asarray(w2).reshape(1, H),  # (1, H)
        "b2": jnp.asarray(b2).reshape(1),         # (1,)  -> SMEM scalar
    }


def attention_forward(hidden, encoder_outputs, prep):
    """hidden: (B, H) f32; encoder_outputs: (S, B, H) f32 (PyTorch seq-major layout).
    Returns context: (B, 1, H), matching the PyTorch module."""
    S, B, H = encoder_outputs.shape

    # Pad batch to a multiple of 8 so a legal sublane tile always exists and
    # grid > 1 is possible for larger batches.  Padded rows are zeros -> finite
    # energies, zero context; they are sliced away below.
    B_pad = ((B + 7) // 8) * 8
    if B_pad != B:
        encoder_outputs = jnp.pad(encoder_outputs,
                                  ((0, 0), (0, B_pad - B), (0, 0)))
        hidden = jnp.pad(hidden, ((0, B_pad - B), (0, 0)))

    tb = _pick_batch_tile(B_pad, S, H)

    # Hoisted hidden projection: one (B,H) x (H,H) matmul + bias in XLA.
    hb = jnp.dot(hidden, prep["w1b_t"]) + prep["b1"][None, :]     # (B_pad, H)

    ctx2d = pl.pallas_call(
        _make_attention_kernel(tb, S, H),
        out_shape=jax.ShapeDtypeStruct((B_pad, H), jnp.float32),
        grid=(B_pad // tb,),
        in_specs=[
            pl.BlockSpec((S, tb, H), lambda i: (0, i, 0)),        # enc: one DMA/step
            pl.BlockSpec((tb, H), lambda i: (i, 0)),              # hb
            pl.BlockSpec((H, H), lambda i: (0, 0)),               # w1a_t (resident)
            pl.BlockSpec((1, H), lambda i: (0, 0)),               # w2 row
            pl.BlockSpec(memory_space=pltpu.MemorySpace.SMEM),    # b2 scalar
        ],
        out_specs=pl.BlockSpec((tb, H), lambda i: (i, 0)),
        compiler_params=pltpu.CompilerParams(
            dimension_semantics=("parallel",),
            vmem_limit_bytes=32 * 1024 * 1024,
        ),
    )(encoder_outputs, hb, prep["w1a_t"], prep["w2_row"], prep["b2"])

    return ctx2d[:B, None, :]                                     # (B, 1, H)


attention = jax.jit(attention_forward)


def _reference_forward(hidden, encoder_outputs, params):
    """Pure-JAX reference mirroring the PyTorch forward."""
    w1, b1, w2, b2 = params["w1"], params["b1"], params["w2"], params["b2"]
    S, B, H = encoder_outputs.shape
    h = jnp.broadcast_to(hidden[None, :, :], (S, B, H)).transpose(1, 0, 2)   # (B,S,H)
    enc = encoder_outputs.transpose(1, 0, 2)                                 # (B,S,H)
    inputs = jnp.concatenate([enc, h], axis=2).reshape(-1, 2 * H)            # (B*S, 2H)
    o = jnp.tanh(inputs @ w1.T + b1) @ w2.T + b2                             # (B*S, 1)
    e = o.reshape(B, S)
    alpha = jax.nn.softmax(e, axis=1)
    context = jnp.einsum("bs,bsh->bh", alpha, enc)[:, None, :]               # (B,1,H)
    return context


if __name__ == "__main__":
    B, S, H = 2, 8, 32
    key = jax.random.PRNGKey(0)
    k1, k2, k3, k4, k5, k6 = jax.random.split(key, 6)

    hidden = jax.random.normal(k1, (B, H), dtype=jnp.float32)
    encoder_outputs = jax.random.normal(k2, (S, B, H), dtype=jnp.float32)

    # Deterministic parameter init (attn1: Linear(2H -> H), attn2: Linear(H -> 1))
    params = {
        "w1": jax.random.normal(k3, (H, 2 * H), dtype=jnp.float32) * (1.0 / jnp.sqrt(2.0 * H)),
        "b1": jax.random.normal(k4, (H,), dtype=jnp.float32) * 0.01,
        "w2": jax.random.normal(k5, (1, H), dtype=jnp.float32) * (1.0 / jnp.sqrt(1.0 * H)),
        "b2": jax.random.normal(k6, (1,), dtype=jnp.float32) * 0.01,
    }

    prep = prepare_attention_params(params)   # one-time weight prep
    ctx = attention(hidden, encoder_outputs, prep)
    ctx = jax.block_until_ready(ctx)

    ref = _reference_forward(hidden, encoder_outputs, params)
    assert ctx.shape == (B, 1, H)
    # Slightly relaxed tolerance to accommodate the EUP approximate-reciprocal
    # (+ Newton) softmax normalization; still well within f32 fidelity.
    assert jnp.allclose(ctx, ref, atol=1e-4, rtol=1e-4), "mismatch vs reference"

    print("KERNEL_OK")
</pallas_src>

<mosaic_0001>
module attributes {stable_mosaic.version = 11 : i64} {
  func.func @kernel(%arg0: i32, %arg1: memref<8x8x32xf32, #tpu.memory_space<vmem>>, %arg2: memref<8x32xf32, #tpu.memory_space<vmem>>, %arg3: memref<32x32xf32, #tpu.memory_space<vmem>>, %arg4: memref<1x32xf32, #tpu.memory_space<vmem>>, %arg5: memref<1xf32, #tpu.memory_space<smem>>, %arg6: memref<8x32xf32, #tpu.memory_space<vmem>>) attributes {dimension_semantics = [#tpu.dimension_semantics<parallel>], iteration_bounds = array<i64: 1>, scalar_prefetch = 0 : i64, scratch_operands = 0 : i64, tpu.core_type = #tpu.core_type<tc>, window_params = [{transform_indices = @transform_0, window_bounds = array<i64: 8, 8, 32>}, {transform_indices = @transform_1, window_bounds = array<i64: 8, 32>}, {pipeline_mode = #tpu.pipeline_mode<synchronous>, transform_indices = @transform_2, window_bounds = array<i64: 32, 32>}, {pipeline_mode = #tpu.pipeline_mode<synchronous>, transform_indices = @transform_3, window_bounds = array<i64: 1, 32>}, {transform_indices = @transform_4, window_bounds = array<i64: 1>}, {transform_indices = @transform_5, window_bounds = array<i64: 8, 32>}]} {
    %c0 = arith.constant 0 : index
    %c0_0 = arith.constant 0 : index
    %c0_1 = arith.constant 0 : index
    %0 = vector.load %arg1[%c0, %c0_0, %c0_1] : memref<8x8x32xf32, #tpu.memory_space<vmem>>, vector<8x8x32xf32>
    %1 = vector.shape_cast %0 : vector<8x8x32xf32> to vector<64x32xf32>
    %c0_2 = arith.constant 0 : index
    %c0_3 = arith.constant 0 : index
    %2 = vector.load %arg3[%c0_2, %c0_3] : memref<32x32xf32, #tpu.memory_space<vmem>>, vector<32x32xf32>
    %cst = arith.constant dense<0.000000e+00> : vector<64x32xf32>
    %3 = tpu.matmul %1, %2, %cst {dimension_numbers = #tpu.dot_dimension_numbers<[1], [0], [0], [1], [0, 0, 1, 1], [], []>} : vector<64x32xf32>, vector<32x32xf32>, vector<64x32xf32> -> vector<64x32xf32>
    %4 = vector.shape_cast %3 : vector<64x32xf32> to vector<8x8x32xf32>
    %c0_4 = arith.constant 0 : index
    %c0_5 = arith.constant 0 : index
    %5 = vector.load %arg2[%c0_4, %c0_5] : memref<8x32xf32, #tpu.memory_space<vmem>>, vector<8x32xf32>
    %6 = vector.shape_cast %5 : vector<8x32xf32> to vector<1x8x32xf32>
    %7 = vector.broadcast %6 : vector<1x8x32xf32> to vector<8x8x32xf32>
    %8 = arith.addf %4, %7 : vector<8x8x32xf32>
    %9 = math.tanh %8 : vector<8x8x32xf32>
    %c0_6 = arith.constant 0 : index
    %c0_7 = arith.constant 0 : index
    %10 = vector.load %arg4[%c0_6, %c0_7] : memref<1x32xf32, #tpu.memory_space<vmem>>, vector<1x32xf32>
    %11 = vector.shape_cast %10 : vector<1x32xf32> to vector<1x1x32xf32>
    %12 = vector.broadcast %11 : vector<1x1x32xf32> to vector<8x8x32xf32>
    %13 = arith.mulf %9, %12 : vector<8x8x32xf32>
    %cst_8 = arith.constant dense<0.000000e+00> : vector<8x8xf32>
    %14 = vector.multi_reduction <add>, %13, %cst_8 [2] : vector<8x8x32xf32> to vector<8x8xf32>
    %15 = vector.shape_cast %14 : vector<8x8xf32> to vector<8x8x1xf32>
    %c0_9 = arith.constant 0 : index
    %16 = memref.load %arg5[%c0_9] : memref<1xf32, #tpu.memory_space<smem>>
    %17 = vector.broadcast %16 : f32 to vector<8x8x1xf32>
    %18 = arith.addf %15, %17 : vector<8x8x1xf32>
    %cst_10 = arith.constant dense<0xFF800000> : vector<8x1xf32>
    %19 = vector.multi_reduction <maximumf>, %18, %cst_10 [0] : vector<8x8x1xf32> to vector<8x1xf32>
    %20 = vector.shape_cast %19 : vector<8x1xf32> to vector<1x8x1xf32>
    %21 = vector.broadcast %20 : vector<1x8x1xf32> to vector<8x8x1xf32>
    %22 = arith.subf %18, %21 : vector<8x8x1xf32>
    %23 = math.exp %22 : vector<8x8x1xf32>
    %cst_11 = arith.constant dense<0.000000e+00> : vector<8x1xf32>
    %24 = vector.multi_reduction <add>, %23, %cst_11 [0] : vector<8x8x1xf32> to vector<8x1xf32>
    %25 = vector.shape_cast %24 : vector<8x1xf32> to vector<1x8x1xf32>
    %26 = tpu.reciprocal %25 {approx = true} : vector<1x8x1xf32> -> vector<1x8x1xf32>
    %27 = arith.mulf %25, %26 : vector<1x8x1xf32>
    %cst_12 = arith.constant 2.000000e+00 : f32
    %28 = vector.broadcast %cst_12 : f32 to vector<1x8x1xf32>
    %29 = arith.subf %28, %27 : vector<1x8x1xf32>
    %30 = arith.mulf %26, %29 : vector<1x8x1xf32>
    %31 = vector.broadcast %30 : vector<1x8x1xf32> to vector<8x8x1xf32>
    %32 = arith.mulf %23, %31 : vector<8x8x1xf32>
    %33 = vector.broadcast %32 : vector<8x8x1xf32> to vector<8x8x32xf32>
    %34 = arith.mulf %33, %0 : vector<8x8x32xf32>
    %cst_13 = arith.constant dense<0.000000e+00> : vector<8x32xf32>
    %35 = vector.multi_reduction <add>, %34, %cst_13 [0] : vector<8x8x32xf32> to vector<8x32xf32>
    %c0_14 = arith.constant 0 : index
    %c0_15 = arith.constant 0 : index
    %36 = vector.load %arg6[%c0_14, %c0_15] : memref<8x32xf32, #tpu.memory_space<vmem>>, vector<8x32xf32>
    tpu.vector_store %arg6[%c0_14, %c0_15], %35 {strides = array<i32>} : memref<8x32xf32, #tpu.memory_space<vmem>>, vector<8x32xf32>,
    return
  }
  func.func @transform_0(%arg0: i32) -> (i32, i32, i32) {
    %c0_i32 = arith.constant 0 : i32
    %c0_i32_0 = arith.constant 0 : i32
    %c0_i32_1 = arith.constant 0 : i32
    return %c0_i32, %arg0, %c0_i32_0 : i32, i32, i32
  }
  func.func @transform_1(%arg0: i32) -> (i32, i32) {
    %c0_i32 = arith.constant 0 : i32
    %c0_i32_0 = arith.constant 0 : i32
    return %arg0, %c0_i32 : i32, i32
  }
  func.func @transform_2(%arg0: i32) -> (i32, i32) {
    %c0_i32 = arith.constant 0 : i32
    %c0_i32_0 = arith.constant 0 : i32
    %c0_i32_1 = arith.constant 0 : i32
    return %c0_i32, %c0_i32_0 : i32, i32
  }
  func.func @transform_3(%arg0: i32) -> (i32, i32) {
    %c0_i32 = arith.constant 0 : i32
    %c0_i32_0 = arith.constant 0 : i32
    %c0_i32_1 = arith.constant 0 : i32
    return %c0_i32, %c0_i32_0 : i32, i32
  }
  func.func @transform_4(%arg0: i32) -> i32 {
    %c0_i32 = arith.constant 0 : i32
    %c0_i32_0 = arith.constant 0 : i32
    return %c0_i32 : i32
  }
  func.func @transform_5(%arg0: i32) -> (i32, i32) {
    %c0_i32 = arith.constant 0 : i32
    %c0_i32_0 = arith.constant 0 : i32
    return %arg0, %c0_i32 : i32, i32
  }
}

</mosaic_0001>

<llo_original>
// kernel: attention_forward.1
$region0: #{attention_forward.1}
  #allocation0 [shape = 'u32[]', space=smem, size = 0x4, offset = 0x4, fixed_abs, tag = 'smem constant byte address 0x4 - core index']
  #allocation1 [shape = 'u32[144,128]{1,0:T(1,128)}', space=vmem, size = 0x12000, scoped, tag = 'internal scratch']
  #allocation2 [shape = 'f32[1]{0:T(128)S(6)}', space=smem, size = 0x200, scoped, tag = 'scoped memory for attention_forward.1']
  %s0 = inlined_call_operand.vmem [shape: f32[8,8,32], index: 0, kind: input, shape index: {}]
  %s1 = inlined_call_operand.vmem [shape: f32[8,32], index: 1, kind: input, shape index: {}]
  %s2 = inlined_call_operand.vmem [shape: f32[32,32], index: 2, kind: input, shape index: {}]
  %s3 = inlined_call_operand.vmem [shape: f32[1,32], index: 3, kind: input, shape index: {}]
  %s4 = inlined_call_operand.<no memory space> [shape: f32[1], index: 4, kind: input, shape index: {}]
  %s5 = inlined_call_operand.vmem [shape: f32[8,32], index: 5, kind: output, shape index: {}]
  %s6 = sld [smem:[#allocation0]]
  $region30: #{attention_forward.1} parent=0
    _
  %s8 = ssub.s32 1, %s6
  %s9 = scalar_select 0, %s8, %s6
  %10 = sst [smem:[#allocation2]] %s4
  // Predicated region
  $region2: #{attention_forward.1} parent=0 // pred_check
    _
  $region3: #{attention_forward.1} parent=0 // pred_check_branch
    %12 = sbr.rel (0) target = $region5
  $region4: #{attention_forward.1} parent=0 // pred_region
    _
  $region5: #{attention_forward.1} parent=0 // pred_fallthru
    _
  // Predicated region
  $region6: #{attention_forward.1} parent=0 // pred_check
    _
  $region7: #{attention_forward.1} parent=0 // pred_check_branch
    %14 = sbr.rel (0) target = $region9
  $region8: #{attention_forward.1} parent=0 // pred_region
    _
  $region9: #{attention_forward.1} parent=0 // pred_fallthru
    _
  // Predicated region
  $region10: #{attention_forward.1} parent=0 // pred_check
    _
  $region11: #{attention_forward.1} parent=0 // pred_check_branch
    %16 = sbr.rel (0) target = $region13
  $region12: #{attention_forward.1} parent=0 // pred_region
    _
  $region13: #{attention_forward.1} parent=0 // pred_fallthru
    _
  // Predicated region
  $region14: #{attention_forward.1} parent=0 // pred_check
    _
  $region15: #{attention_forward.1} parent=0 // pred_check_branch
    %18 = sbr.rel (0) target = $region17
  $region16: #{attention_forward.1} parent=0 // pred_region
    _
  $region17: #{attention_forward.1} parent=0 // pred_fallthru
    _
  // Predicated region
  $region18: #{attention_forward.1} parent=0 // pred_check
    _
  $region19: #{attention_forward.1} parent=0 // pred_check_branch
    %20 = sbr.rel (0) target = $region21
  $region20: #{attention_forward.1} parent=0 // pred_region
    _
  $region21: #{attention_forward.1} parent=0 // pred_fallthru
    _
  %v21 = vld [vmem:[%s0] sm:$0xff]
  %v22 = vld [vmem:[%s0 + $0x8] sm:$0xff]
  %v23 = vld [vmem:[%s0 + $0x10] sm:$0xff]
  %v24 = vld [vmem:[%s0 + $0x18] sm:$0xff]
  %v25 = vld [vmem:[%s0 + $0x20] sm:$0xff]
  %v26 = vld [vmem:[%s0 + $0x28] sm:$0xff]
  %v27 = vld [vmem:[%s0 + $0x30] sm:$0xff]
  %v28 = vld [vmem:[%s0 + $0x38] sm:$0xff]
  %v29 = vld [vmem:[%s2] sm:$0xff]
  %v30 = vld [vmem:[%s2 + $0x8] sm:$0xff]
  %v31 = vld [vmem:[%s2 + $0x10] sm:$0xff]
  %v32 = vld [vmem:[%s2 + $0x18] sm:$0xff]
  %vm33 = vcmask 261120
  %v35 = vsel %vm33, %v21, 0
  %v38 = vsel %vm33, %v22, 0
  %v41 = vsel %vm33, %v23, 0
  %v44 = vsel %vm33, %v24, 0
  %v47 = vsel %vm33, %v25, 0
  %v50 = vsel %vm33, %v26, 0
  %v53 = vsel %vm33, %v27, 0
  %v56 = vsel %vm33, %v28, 0
  %58 = vmatprep.subr.mxu0 0.0
  %59 = vmatpush1.msra.mxu0 %v29
  %60 = vmatprep.subr.mxu0 0.0
  %61 = vmatpush1.msra.mxu0 %v30
  %62 = vmatprep.subr.mxu0 0.0
  %63 = vmatpush1.msra.mxu0 %v31
  %64 = vmatprep.subr.mxu0 0.0
  %65 = vmatpush1.msra.mxu0 %v32
  %66 = vmatprep.subr.mxu0 0.0
  %67 = vmatpush1.msra.mxu0 0.0
  %68 = vmatprep.subr.mxu0 0.0
  %69 = vmatpush1.msra.mxu0 0.0
  %70 = vmatprep.subr.mxu0 0.0
  %71 = vmatpush1.msra.mxu0 0.0
  %72 = vmatprep.subr.mxu0 0.0
  %73 = vmatpush1.msra.mxu0 0.0
  %74 = vmatprep.subr.mxu0 0.0
  %75 = vmatpush1.msra.mxu0 0.0
  %76 = vmatprep.subr.mxu0 0.0
  %77 = vmatpush1.msra.mxu0 0.0
  %78 = vmatprep.subr.mxu0 0.0
  %79 = vmatpush1.msra.mxu0 0.0
  %80 = vmatprep.subr.mxu0 0.0
  %81 = vmatpush1.msra.mxu0 0.0
  %82 = vmatprep.subr.mxu0 0.0
  %83 = vmatpush1.msra.mxu0 0.0
  %84 = vmatprep.subr.mxu0 0.0
  %85 = vmatpush1.msra.mxu0 0.0
  %86 = vmatprep.subr.mxu0 0.0
  %87 = vmatpush1.msra.mxu0 0.0
  %88 = vmatprep.subr.mxu0 0.0
  %89 = vmatpush1.msra.mxu0 0.0
  %90 = vmatprep.subr.mxu0 0.0
  %91 = vmatpush1.msra.mxu0 0.0
  %92 = vmatprep.subr.mxu0 0.0
  %93 = vmatpush1.msra.mxu0 0.0
  %94 = vmatprep.subr.mxu0 0.0
  %95 = vmatpush1.msra.mxu0 0.0
  %96 = vmatprep.subr.mxu0 0.0
  %97 = vmatpush1.msra.mxu0 0.0
  %98 = vmatprep.subr.mxu0 0.0
  %99 = vmatpush1.msra.mxu0 0.0
  %100 = vmatprep.subr.mxu0 0.0
  %101 = vmatpush1.msra.mxu0 0.0
  %102 = vmatprep.subr.mxu0 0.0
  %103 = vmatpush1.msra.mxu0 0.0
  %104 = vmatprep.subr.mxu0 0.0
  %105 = vmatpush1.msra.mxu0 0.0
  %106 = vmatprep.subr.mxu0 0.0
  %107 = vmatpush1.msra.mxu0 0.0
  %108 = vmatprep.subr.mxu0 0.0
  %109 = vmatpush1.msra.mxu0 0.0
  %110 = vmatprep.subr.mxu0 0.0
  %111 = vmatpush1.msra.mxu0 0.0
  %112 = vmatprep.subr.mxu0 0.0
  %113 = vmatpush1.msra.mxu0 0.0
  %114 = vmatprep.subr.mxu0 0.0
  %115 = vmatpush1.msra.mxu0 0.0
  %116 = vmatprep.subr.mxu0 0.0
  %117 = vmatpush1.msra.mxu0 0.0
  %118 = vmatprep.subr.mxu0 0.0
  %119 = vmatpush1.msra.mxu0 0.0
  %120 = vmatprep.subr.mxu0 0.0
  %121 = vmatpush1.msra.mxu0 0.0
  %122 = vmatprep.mubr.f32.mxu0 0.0
  %123 = vmatmul.mubr.f32.gmra.mrb[0].mxu0 %v35
  %v124 = vpop.f32.mrb[0].mxu0
  %v125 = vadd.f32 0.0, %v124
  %v126 = vpop.f32.mrb[0].mxu0
  %127 = vmatprep.mubr.f32.mxu0 0.0
  %128 = vmatmul.mubr.f32.gmra.mrb[0].mxu0 %v38
  %v129 = vpop.f32.mrb[0].mxu0
  %v130 = vadd.f32 0.0, %v129
  %v131 = vpop.f32.mrb[0].mxu0
  %132 = vmatprep.mubr.f32.mxu0 0.0
  %133 = vmatmul.mubr.f32.gmra.mrb[0].mxu0 %v41
  %v134 = vpop.f32.mrb[0].mxu0
  %v135 = vadd.f32 0.0, %v134
  %v136 = vpop.f32.mrb[0].mxu0
  %137 = vmatprep.mubr.f32.mxu0 0.0
  %138 = vmatmul.mubr.f32.gmra.mrb[0].mxu0 %v44
  %v139 = vpop.f32.mrb[0].mxu0
  %v140 = vadd.f32 0.0, %v139
  %v141 = vpop.f32.mrb[0].mxu0
  %142 = vmatprep.mubr.f32.mxu0 0.0
  %143 = vmatmul.mubr.f32.gmra.mrb[0].mxu0 %v47
  %v144 = vpop.f32.mrb[0].mxu0
  %v145 = vadd.f32 0.0, %v144
  %v146 = vpop.f32.mrb[0].mxu0
  %147 = vmatprep.mubr.f32.mxu0 0.0
  %148 = vmatmul.mubr.f32.gmra.mrb[0].mxu0 %v50
  %v149 = vpop.f32.mrb[0].mxu0
  %v150 = vadd.f32 0.0, %v149
  %v151 = vpop.f32.mrb[0].mxu0
  %152 = vmatprep.mubr.f32.mxu0 0.0
  %153 = vmatmul.mubr.f32.gmra.mrb[0].mxu0 %v53
  %v154 = vpop.f32.mrb[0].mxu0
  %v155 = vadd.f32 0.0, %v154
  %v156 = vpop.f32.mrb[0].mxu0
  %157 = vmatprep.mubr.f32.mxu0 0.0
  %158 = vmatmul.mubr.f32.gmra.mrb[0].mxu0 %v56
  %v159 = vpop.f32.mrb[0].mxu0
  %v160 = vadd.f32 0.0, %v159
  %v161 = vpop.f32.mrb[0].mxu0
  %162 = vdwg.mxu0
  %v163 = vld [vmem:[%s1] sm:$0xff]
  %v164 = vadd.f32 %v125, %v163
  %v165 = vadd.f32 %v130, %v163
  %v166 = vadd.f32 %v135, %v163
  %v167 = vadd.f32 %v140, %v163
  %v168 = vadd.f32 %v145, %v163
  %v169 = vadd.f32 %v150, %v163
  %v170 = vadd.f32 %v155, %v163
  %v171 = vadd.f32 %v160, %v163
  %v172 = vtanh.pop %v164
  %v173 = vtanh.pop %v165
  %v174 = vtanh.pop %v166
  %v175 = vtanh.pop %v167
  %v176 = vtanh.pop %v168
  %v177 = vtanh.pop %v169
  %v178 = vtanh.pop %v170
  %v179 = vtanh.pop %v171
  %v180 = vld [vmem:[%s3] sm:$0x1]
  %v182 = vlaneseq
  %v183 = vshrl.u32 %v182, 7
  %v184 = vsub.s32 0, %v183
  %v185 = vrot.slane %v180, %v184
  %v187 = vmul.f32 %v172, %v185
  %v188 = vmul.f32 %v173, %v185
  %v189 = vmul.f32 %v174, %v185
  %v190 = vmul.f32 %v175, %v185
  %v191 = vmul.f32 %v176, %v185
  %v192 = vmul.f32 %v177, %v185
  %v193 = vmul.f32 %v178, %v185
  %v194 = vmul.f32 %v179, %v185
  %v195 = vsel %vm33, %v187, 0.0
  %196 = vadd.xlane.f32.xlu0 %v195
  %v197 = vpop.xlane.xlu0 %196
  %v198 = vsel %vm33, %v188, 0.0
  %199 = vadd.xlane.f32.xlu0 %v198
  %v200 = vpop.xlane.xlu0 %199
  %v201 = vsel %vm33, %v189, 0.0
  %202 = vadd.xlane.f32.xlu0 %v201
  %v203 = vpop.xlane.xlu0 %202
  %v204 = vsel %vm33, %v190, 0.0
  %205 = vadd.xlane.f32.xlu0 %v204
  %v206 = vpop.xlane.xlu0 %205
  %v207 = vsel %vm33, %v191, 0.0
  %208 = vadd.xlane.f32.xlu0 %v207
  %v209 = vpop.xlane.xlu0 %208
  %v210 = vsel %vm33, %v192, 0.0
  %211 = vadd.xlane.f32.xlu0 %v210
  %v212 = vpop.xlane.xlu0 %211
  %v213 = vsel %vm33, %v193, 0.0
  %214 = vadd.xlane.f32.xlu0 %v213
  %v215 = vpop.xlane.xlu0 %214
  %v216 = vsel %vm33, %v194, 0.0
  %217 = vadd.xlane.f32.xlu0 %v216
  %v218 = vpop.xlane.xlu0 %217
  %s219 = sld [smem:[#allocation2]]
  %v220 = vstv %s219
  %v221 = vadd.f32 %v197, %v220
  %v222 = vadd.f32 %v200, %v220
  %v223 = vadd.f32 %v203, %v220
  %v224 = vadd.f32 %v206, %v220
  %v225 = vadd.f32 %v209, %v220
  %v226 = vadd.f32 %v212, %v220
  %v227 = vadd.f32 %v215, %v220
  %v228 = vadd.f32 %v218, %v220
  %v229 = vmax.f32 %v221, %v225
  %v230 = vmax.f32 %v222, %v226
  %v231 = vmax.f32 %v223, %v227
  %v232 = vmax.f32 %v224, %v228
  %v233 = vmax.f32 %v229, %v230
  %v234 = vmax.f32 %v231, %v232
  %v235 = vmax.f32 %v233, %v234
  %v236 = vsub.f32 %v221, %v235
  %v237 = vsub.f32 %v222, %v235
  %v238 = vsub.f32 %v223, %v235
  %v239 = vsub.f32 %v224, %v235
  %v240 = vsub.f32 %v225, %v235
  %v241 = vsub.f32 %v226, %v235
  %v242 = vsub.f32 %v227, %v235
  %v243 = vsub.f32 %v228, %v235
  %v244 = vmul.f32 %v236, 1.442695
  %v245 = vpow.pop %v244
  %v246 = vmul.f32 %v237, 1.442695
  %v247 = vpow.pop %v246
  %v248 = vmul.f32 %v238, 1.442695
  %v249 = vpow.pop %v248
  %v250 = vmul.f32 %v239, 1.442695
  %v251 = vpow.pop %v250
  %v252 = vmul.f32 %v240, 1.442695
  %v253 = vpow.pop %v252
  %v254 = vmul.f32 %v241, 1.442695
  %v255 = vpow.pop %v254
  %v256 = vmul.f32 %v242, 1.442695
  %v257 = vpow.pop %v256
  %v258 = vmul.f32 %v243, 1.442695
  %v259 = vpow.pop %v258
  %v260 = vadd.f32 %v245, %v247
  %v261 = vadd.f32 %v260, %v249
  %v262 = vadd.f32 %v261, %v251
  %v263 = vadd.f32 %v262, %v253
  %v264 = vadd.f32 %v263, %v255
  %v265 = vadd.f32 %v264, %v257
  %v266 = vadd.f32 %v265, %v259
  %v267 = vrcp.pop %v266
  %v268 = vmul.f32 %v266, %v267
  %v269 = vsub.f32 2.0, %v268
  %v270 = vmul.f32 %v267, %v269
  %v271 = vmul.f32 %v245, %v270
  %v272 = vmul.f32 %v247, %v270
  %v273 = vmul.f32 %v249, %v270
  %v274 = vmul.f32 %v251, %v270
  %v275 = vmul.f32 %v253, %v270
  %v276 = vmul.f32 %v255, %v270
  %v277 = vmul.f32 %v257, %v270
  %v278 = vmul.f32 %v259, %v270
  %v279 = vmul.f32 %v271, %v21
  %v280 = vmul.f32 %v272, %v22
  %v281 = vmul.f32 %v273, %v23
  %v282 = vmul.f32 %v274, %v24
  %v283 = vmul.f32 %v275, %v25
  %v284 = vmul.f32 %v276, %v26
  %v285 = vmul.f32 %v277, %v27
  %v286 = vmul.f32 %v278, %v28
  %v287 = vsel %vm33, %v279, 0.0
  %v288 = vsel %vm33, %v280, 0.0
  %v289 = vadd.f32 %v287, %v288
  %v290 = vsel %vm33, %v281, 0.0
  %v291 = vadd.f32 %v289, %v290
  %v292 = vsel %vm33, %v282, 0.0
  %v293 = vadd.f32 %v291, %v292
  %v294 = vsel %vm33, %v283, 0.0
  %v295 = vadd.f32 %v293, %v294
  %v296 = vsel %vm33, %v284, 0.0
  %v297 = vadd.f32 %v295, %v296
  %v298 = vsel %vm33, %v285, 0.0
  %v299 = vadd.f32 %v297, %v298
  %v300 = vsel %vm33, %v286, 0.0
  %v301 = vadd.f32 %v299, %v300
  %302 = vst.msk [vmem:[%s5] sm:$0xff] %vm33, %v301
  // Predicated region
  $region22: #{attention_forward.1} parent=0 // pred_check
    _
  $region23: #{attention_forward.1} parent=0 // pred_check_branch
    %304 = sbr.rel (0) target = $region25
  $region24: #{attention_forward.1} parent=0 // pred_region
    _
  $region25: #{attention_forward.1} parent=0 // pred_fallthru
    _
  // Predicated region
  $region26: #{attention_forward.1} parent=0 // pred_check
    _
  $region27: #{attention_forward.1} parent=0 // pred_check_branch
    %306 = sbr.rel (0) target = $region29
  $region28: #{attention_forward.1} parent=0 // pred_region
    _
  $region29: #{attention_forward.1} parent=0 // pred_fallthru
    _

</llo_original>
